<compile_context>
chip_gen: v7x
topology: tpu7x:2x2x1
jax: 0.10.0
libtpu: 0.0.40
codegen_flags: <defaults>
</compile_context>

<pallas_src>
import math
from functools import partial

import jax
import jax.numpy as jnp
from jax.experimental import pallas as pl

# ----------------------------- configuration --------------------------------
N_LAYERS = 2
N_HEADS = 4
D_MODEL = 32
SEQ = 8
VOCAB = 128
BSZ = 2
N_SAMPLES = 2                      # pruning_cfg.n_samples
K_TOTAL = N_SAMPLES + 1            # original batch + n_samples ablated copies
LAMB = 2e-4                        # pruning_cfg.lamb
TEMP_C = 1e-3                      # pruning_cfg.temp_scheduler(...)
HC_ENDPOINTS = (-0.1, 1.1)         # pruning_cfg.hard_concrete_endpoints
LOG_RATIO = math.log(-HC_ENDPOINTS[0] / HC_ENDPOINTS[1])

# TODO(synk): the real base_model (HookedTransformer), LinePlot logging,
# seaborn plotting and cuda timing events have no Pallas equivalent; a
# deterministic synthetic base model is used instead.


# --------------------------- kernel 1: ablation blend ------------------------
def _blend_kernel(x_ref, m_ref, mo_ref, o_ref):
    # x: (B, R, C) activation; m: (B, C) per-(row,channel) mask; mo: (1, C).
    # out = (1 - m) * modal + m * x     (identity rows carry m == 1)
    m = m_ref[...][:, None, :]                 # (B, 1, C)
    mo = mo_ref[...][None, :, :]               # (1, 1, C)
    o_ref[...] = (1.0 - m) * mo + m * x_ref[...]


def ablation_blend(x3, mask2, modal2):
    # x3: (B, R, C) whole-array single block (no grid, no per-step overhead).
    # Block == full array, so no %128 constraint on C (review concern fixed).
    b, r, c = x3.shape
    return pl.pallas_call(
        _blend_kernel,
        out_shape=jax.ShapeDtypeStruct((b, r, c), x3.dtype),
        grid=(1,),
        in_specs=[
            pl.BlockSpec((b, r, c), lambda i: (0, 0, 0)),
            pl.BlockSpec((b, c), lambda i: (0, 0)),
            pl.BlockSpec((1, c), lambda i: (0, 0)),
        ],
        out_specs=pl.BlockSpec((b, r, c), lambda i: (0, 0, 0)),
    )(x3, mask2, modal2)


# ------------- kernel 2: fused last-token select + KL + total loss -----------
def _tail_kernel(resid_ref, ltm_ref, wu_ref, sp_ref, kl_ref, loss_ref, *,
                 bsz, n_samples, lamb, temp_c, log_ratio):
    # resid: (K, bsz, S, D); ltm: (bsz, S) one-hot; wu: (D, V); sp: (N, 2)
    resid = resid_ref[...]
    ltm = ltm_ref[...]
    sel = jnp.sum(resid * ltm[None, :, :, None], axis=2)       # (K, bsz, D)
    k, b, d = sel.shape
    sel2 = sel.reshape(k * b, d)                                # (K*bsz, D)

    logits = jnp.dot(sel2, wu_ref[...],
                     preferred_element_type=jnp.float32)       # (K*bsz, V)
    v = logits.shape[-1]
    mx = jnp.max(logits, axis=-1, keepdims=True)
    lse = jnp.log(jnp.sum(jnp.exp(logits - mx), axis=-1, keepdims=True)) + mx
    logp = logits - lse                                         # log_softmax

    lo = logp[:bsz]                                             # orig  (bsz, V)
    lp = logp[bsz:].reshape(n_samples, bsz, v)                  # pruned
    p = jnp.exp(lo)
    kl = jnp.sum(p[None] * (lo[None] - lp), axis=-1)            # (ns, bsz)
    kl_ref[...] = kl

    # complexity / temperature / total loss (folded in; no extra launch)
    sp = sp_ref[...]                                            # (N, 2)
    p0 = sp[:, 0:1]
    p1 = sp[:, 1:2]
    complexity = jax.nn.sigmoid(p0 - jnp.maximum(p1, 0.0) * log_ratio)
    kl_mean = jnp.sum(kl, keepdims=True) / (n_samples * bsz)
    loss_ref[...] = (kl_mean
                     + lamb * jnp.sum(complexity, keepdims=True)
                     + temp_c * jnp.sum(p1 * p1, keepdims=True))


def fused_last_token_kl_loss(resid4, ltm, w_u, sampling_params):
    k, bsz, s, d = resid4.shape
    ns = k - 1
    v = w_u.shape[1]
    n = sampling_params.shape[0]
    kernel = partial(_tail_kernel, bsz=bsz, n_samples=ns,
                     lamb=LAMB, temp_c=TEMP_C, log_ratio=LOG_RATIO)
    kl, loss = pl.pallas_call(
        kernel,
        out_shape=(jax.ShapeDtypeStruct((ns, bsz), jnp.float32),
                   jax.ShapeDtypeStruct((1, 1), jnp.float32)),
        grid=(1,),
        in_specs=[
            pl.BlockSpec((k, bsz, s, d), lambda i: (0, 0, 0, 0)),
            pl.BlockSpec((bsz, s), lambda i: (0, 0)),
            pl.BlockSpec((d, v), lambda i: (0, 0)),
            pl.BlockSpec((n, 2), lambda i: (0, 0)),
        ],
        out_specs=(pl.BlockSpec((ns, bsz), lambda i: (0, 0)),
                   pl.BlockSpec((1, 1), lambda i: (0, 0))),
    )(resid4, ltm, w_u, sampling_params)
    return kl, loss


# ------------------------------ forward pass ---------------------------------
def vertex_pruner_forward(tokens, last_token_pos, params, use_pallas=True):
    w_e, w_attn, w_mlp, w_u = (params["w_e"], params["w_attn"],
                               params["w_mlp"], params["w_u"])
    modal_attention, modal_mlp = params["modal_attention"], params["modal_mlp"]
    mask_attn, mask_mlp = params["mask_attn"], params["mask_mlp"]
    sampling_params = params["sampling_params"]

    bsz, seq = tokens.shape
    n_total = K_TOTAL * bsz
    # last_token_mask (no_grad scatter in torch)
    ltm = jax.nn.one_hot(last_token_pos, seq, dtype=jnp.float32)      # (bsz, S)

    # batch.repeat(n_samples + 1, 1)
    tokens_rep = jnp.tile(tokens, (K_TOTAL, 1))                        # (B, S)
    resid = w_e[tokens_rep]                                            # (B, S, D)

    if use_pallas:
        # Precompute tiny full-batch masks once (identity rows for the first
        # bsz copies), so no per-layer slice/concat or activation transposes.
        fm_attn = jnp.concatenate(
            [jnp.ones((N_LAYERS, bsz, N_HEADS), jnp.float32), mask_attn],
            axis=1)                                                    # (L,B,H)
        attn_mask = jnp.broadcast_to(
            fm_attn[..., None], (N_LAYERS, n_total, N_HEADS, D_MODEL)
        ).reshape(N_LAYERS, n_total, N_HEADS * D_MODEL)                # (L,B,HD)
        attn_modal = modal_attention.reshape(N_LAYERS, 1,
                                             N_HEADS * D_MODEL)        # (L,1,HD)
        fm_mlp = jnp.concatenate(
            [jnp.ones((N_LAYERS, bsz), jnp.float32), mask_mlp], axis=1)  # (L,B)
        mlp_mask = jnp.broadcast_to(
            fm_mlp[..., None], (N_LAYERS, n_total, D_MODEL))           # (L,B,D)
        mlp_modal = modal_mlp.reshape(N_LAYERS, 1, D_MODEL)            # (L,1,D)

    for layer in range(N_LAYERS):
        # synthetic attn.hook_result  (B, S, H, D)
        attn_res = jnp.einsum("bsd,hde->bshe", resid, w_attn[layer])
        if use_pallas:
            x3 = attn_res.reshape(n_total, seq, N_HEADS * D_MODEL)     # free
            y3 = ablation_blend(x3, attn_mask[layer], attn_modal[layer])
            attn_res = y3.reshape(n_total, seq, N_HEADS, D_MODEL)
        else:
            abl = attn_res[bsz:]
            mm = mask_attn[layer][:, None, :, None]
            blended = (1.0 - mm) * modal_attention[layer][None, None] + mm * abl
            attn_res = jnp.concatenate([attn_res[:bsz], blended], axis=0)
        resid = resid + attn_res.sum(axis=2)

        # synthetic hook_mlp_out  (B, S, D)
        mlp_out = jnp.tanh(resid) @ w_mlp[layer]
        if use_pallas:
            mlp_out = ablation_blend(mlp_out, mlp_mask[layer],
                                     mlp_modal[layer])
        else:
            abl = mlp_out[bsz:]
            mm = mask_mlp[layer][:, None, None]
            blended = (1.0 - mm) * modal_mlp[layer][None, None, :] + mm * abl
            mlp_out = jnp.concatenate([mlp_out[:bsz], blended], axis=0)
        resid = resid + mlp_out

    # final_hook_last_token: unflatten(0, (-1, bsz)) — free contiguous reshape
    resid4 = resid.reshape(K_TOTAL, bsz, seq, D_MODEL)

    if use_pallas:
        # fused: masked last-token sum + unembed + log_softmax + KL + loss
        kl_losses, loss11 = fused_last_token_kl_loss(resid4, ltm, w_u,
                                                     sampling_params)
        loss = loss11[0, 0]
    else:
        selected = (resid4 * ltm[None, :, :, None]).sum(axis=2)        # (K,bsz,D)
        logits = selected @ w_u
        logp = jax.nn.log_softmax(logits, axis=-1)
        orig, pruned = logp[0], logp[1:]
        kl_losses = jnp.sum(jnp.exp(orig)[None] * (orig[None] - pruned), axis=-1)
        p0, p1 = sampling_params[:, 0], sampling_params[:, 1]
        complexity = jax.nn.sigmoid(p0 - jnp.maximum(p1, 0.0) * LOG_RATIO)
        loss = (kl_losses.mean() + LAMB * complexity.sum()
                + TEMP_C * jnp.sum(p1 * p1))

    return loss, sampling_params, kl_losses


# ------------------------- deterministic parameter init ----------------------
def build_params(key):
    ks = jax.random.split(key, 10)
    params = {
        "w_e": 0.5 * jax.random.normal(ks[0], (VOCAB, D_MODEL), jnp.float32),
        "w_attn": 0.05 * jax.random.normal(
            ks[1], (N_LAYERS, N_HEADS, D_MODEL, D_MODEL), jnp.float32),
        "w_mlp": 0.05 * jax.random.normal(
            ks[2], (N_LAYERS, D_MODEL, D_MODEL), jnp.float32),
        "w_u": 0.3 * jax.random.normal(ks[3], (D_MODEL, VOCAB), jnp.float32),
        # nn.Parameter init_modes
        "modal_attention": 0.1 * jax.random.normal(
            ks[4], (N_LAYERS, N_HEADS, D_MODEL), jnp.float32),
        "modal_mlp": 0.1 * jax.random.normal(
            ks[5], (N_LAYERS, D_MODEL), jnp.float32),
        # mask_sampler.sampled_mask (hard-concrete samples in [0, 1])
        "mask_attn": jax.random.uniform(
            ks[6], (N_LAYERS, N_SAMPLES * BSZ, N_HEADS), jnp.float32),
        "mask_mlp": jax.random.uniform(
            ks[7], (N_LAYERS, N_SAMPLES * BSZ), jnp.float32),
        # all_sampling_params = mask_sampler()  -> (num_nodes, 2)
        "sampling_params": jax.random.normal(
            ks[8], (N_LAYERS * (N_HEADS + 1), 2), jnp.float32),
    }
    return params, ks[9]


if __name__ == "__main__":
    params, key = build_params(jax.random.PRNGKey(0))
    k_tok, k_pos = jax.random.split(key)
    tokens = jax.random.randint(k_tok, (BSZ, SEQ), 0, VOCAB, dtype=jnp.int32)
    last_token_pos = jax.random.randint(k_pos, (BSZ,), 0, SEQ, dtype=jnp.int32)

    loss_p, sp_p, kl_p = vertex_pruner_forward(tokens, last_token_pos, params,
                                               use_pallas=True)
    jax.block_until_ready((loss_p, sp_p, kl_p))

    # pure-JAX reference of the same forward
    loss_r, _, kl_r = vertex_pruner_forward(tokens, last_token_pos, params,
                                            use_pallas=False)
    jax.block_until_ready((loss_r, kl_r))

    assert bool(jnp.allclose(kl_p, kl_r, rtol=1e-2, atol=1e-5)), (kl_p, kl_r)
    assert bool(jnp.allclose(loss_p, loss_r, rtol=1e-2, atol=1e-5)), (loss_p, loss_r)
    print("KERNEL_OK")
</pallas_src>

<mosaic_0001>
module attributes {stable_mosaic.version = 11 : i64} {
  func.func @_blend_kernel(%arg0: i32, %arg1: memref<6x8x128xf32, #tpu.memory_space<vmem>>, %arg2: memref<6x128xf32, #tpu.memory_space<vmem>>, %arg3: memref<1x128xf32, #tpu.memory_space<vmem>>, %arg4: memref<6x8x128xf32, #tpu.memory_space<vmem>>) attributes {dimension_semantics = [#tpu.dimension_semantics<arbitrary>], iteration_bounds = array<i64: 1>, scalar_prefetch = 0 : i64, scratch_operands = 0 : i64, tpu.core_type = #tpu.core_type<tc>, window_params = [{pipeline_mode = #tpu.pipeline_mode<synchronous>, transform_indices = @transform_0, window_bounds = array<i64: 6, 8, 128>}, {pipeline_mode = #tpu.pipeline_mode<synchronous>, transform_indices = @transform_1, window_bounds = array<i64: 6, 128>}, {pipeline_mode = #tpu.pipeline_mode<synchronous>, transform_indices = @transform_2, window_bounds = array<i64: 1, 128>}, {pipeline_mode = #tpu.pipeline_mode<synchronous>, transform_indices = @transform_3, window_bounds = array<i64: 6, 8, 128>}]} {
    %c0 = arith.constant 0 : index
    %c0_0 = arith.constant 0 : index
    %0 = vector.load %arg2[%c0, %c0_0] : memref<6x128xf32, #tpu.memory_space<vmem>>, vector<6x128xf32>
    %1 = vector.shape_cast %0 : vector<6x128xf32> to vector<6x1x128xf32>
    %c0_1 = arith.constant 0 : index
    %c0_2 = arith.constant 0 : index
    %2 = vector.load %arg3[%c0_1, %c0_2] : memref<1x128xf32, #tpu.memory_space<vmem>>, vector<1x128xf32>
    %3 = vector.shape_cast %2 : vector<1x128xf32> to vector<1x1x128xf32>
    %cst = arith.constant 1.000000e+00 : f32
    %4 = vector.broadcast %cst : f32 to vector<6x1x128xf32>
    %5 = arith.subf %4, %1 : vector<6x1x128xf32>
    %6 = vector.broadcast %3 : vector<1x1x128xf32> to vector<6x1x128xf32>
    %7 = arith.mulf %5, %6 : vector<6x1x128xf32>
    %c0_3 = arith.constant 0 : index
    %c0_4 = arith.constant 0 : index
    %c0_5 = arith.constant 0 : index
    %8 = vector.load %arg1[%c0_3, %c0_4, %c0_5] : memref<6x8x128xf32, #tpu.memory_space<vmem>>, vector<6x8x128xf32>
    %9 = vector.broadcast %1 : vector<6x1x128xf32> to vector<6x8x128xf32>
    %10 = arith.mulf %9, %8 : vector<6x8x128xf32>
    %11 = vector.broadcast %7 : vector<6x1x128xf32> to vector<6x8x128xf32>
    %12 = arith.addf %11, %10 : vector<6x8x128xf32>
    %c0_6 = arith.constant 0 : index
    %c0_7 = arith.constant 0 : index
    %c0_8 = arith.constant 0 : index
    %13 = vector.load %arg4[%c0_6, %c0_7, %c0_8] : memref<6x8x128xf32, #tpu.memory_space<vmem>>, vector<6x8x128xf32>
    tpu.vector_store %arg4[%c0_6, %c0_7, %c0_8], %12 {strides = array<i32>} : memref<6x8x128xf32, #tpu.memory_space<vmem>>, vector<6x8x128xf32>,
    return
  }
  func.func @transform_0(%arg0: i32) -> (i32, i32, i32) {
    %c0_i32 = arith.constant 0 : i32
    %c0_i32_0 = arith.constant 0 : i32
    %c0_i32_1 = arith.constant 0 : i32
    %c0_i32_2 = arith.constant 0 : i32
    return %c0_i32, %c0_i32_0, %c0_i32_1 : i32, i32, i32
  }
  func.func @transform_1(%arg0: i32) -> (i32, i32) {
    %c0_i32 = arith.constant 0 : i32
    %c0_i32_0 = arith.constant 0 : i32
    %c0_i32_1 = arith.constant 0 : i32
    return %c0_i32, %c0_i32_0 : i32, i32
  }
  func.func @transform_2(%arg0: i32) -> (i32, i32) {
    %c0_i32 = arith.constant 0 : i32
    %c0_i32_0 = arith.constant 0 : i32
    %c0_i32_1 = arith.constant 0 : i32
    return %c0_i32, %c0_i32_0 : i32, i32
  }
  func.func @transform_3(%arg0: i32) -> (i32, i32, i32) {
    %c0_i32 = arith.constant 0 : i32
    %c0_i32_0 = arith.constant 0 : i32
    %c0_i32_1 = arith.constant 0 : i32
    %c0_i32_2 = arith.constant 0 : i32
    return %c0_i32, %c0_i32_0, %c0_i32_1 : i32, i32, i32
  }
}

</mosaic_0001>

<llo_original>
// kernel: tpu_custom_call.1
$region0: #{tpu_custom_call.1}
  #allocation0 [shape = 'u32[]', space=smem, size = 0x4, offset = 0x4, fixed_abs, tag = 'smem constant byte address 0x4 - core index']
  #allocation1 [shape = 'u32[144,128]{1,0:T(1,128)}', space=vmem, size = 0x12000, scoped, tag = 'internal scratch']
  %s0 = inlined_call_operand.hbm [shape: f32[6,8,128], index: 0, kind: input, shape index: {}]
  %s1 = inlined_call_operand.hbm [shape: f32[6,128], index: 1, kind: input, shape index: {}]
  %s2 = inlined_call_operand.vmem [shape: f32[1,128], index: 2, kind: input, shape index: {}]
  %s3 = inlined_call_operand.hbm [shape: f32[6,8,128], index: 3, kind: output, shape index: {}]
  %s4 = sld [smem:[#allocation0]]
  $region30: #{tpu_custom_call.1} parent=0
    _
  %s6 = ssub.s32 1, %s4
  %s7 = scalar_select 0, %s6, %s4
  $region1: #{tpu_custom_call.1} parent=0
    #allocation2 [shape = 'u8[24576]{0}', space=vmem, size = 0x6000, scoped, tag = 'input window, operand 0, single buffered']
    #allocation3 [shape = 's32[1]{0}', space=sflag, size = 0x4, scoped, tag = 'scoped memory for tpu_custom_call.1']
    #allocation4 [shape = 's32[1]{0}', space=sflag, size = 0x4, scoped, tag = 'scoped memory for tpu_custom_call.1']
    #allocation5 [shape = 'u8[4096]{0}', space=vmem, size = 0x1000, scoped, tag = 'input window, operand 1, single buffered']
    #allocation6 [shape = 's32[1]{0}', space=sflag, size = 0x4, scoped, tag = 'scoped memory for tpu_custom_call.1']
    #allocation7 [shape = 'u8[24576]{0}', space=vmem, size = 0x6000, scoped, tag = 'output window, operand 0, single buffered']
    %8 = vsyncpa [#allocation3], 0
    %9 = vsyncpa [#allocation6], 0
    %10 = vsyncpa [#allocation4], 0
    // Predicated region
    $region2: #{tpu_custom_call.1} parent=1 // pred_check
      _
    $region3: #{tpu_custom_call.1} parent=1 // pred_check_branch
      %12 = sbr.rel (0) target = $region5
    $region4: #{tpu_custom_call.1} parent=1 // pred_region
      %s14 = ssub.s32 768, 768
      %15 = vsyncadd [#allocation3], %s14
      %s16 = sshll.u32 [#allocation2], 4
      %s17 = int_to_ptr.vmem [resolvable:$true] %s16
      %22 = dma.hbm_to_vmem [thread:$0]  %s0, 768, %s17, [#allocation3], 128, 128, 8
    $region5: #{tpu_custom_call.1} parent=1 // pred_fallthru
      _
    // Predicated region
    $region6: #{tpu_custom_call.1} parent=1 // pred_check
      _
    $region7: #{tpu_custom_call.1} parent=1 // pred_check_branch
      %24 = sbr.rel (0) target = $region9
    $region8: #{tpu_custom_call.1} parent=1 // pred_region
      %s26 = ssub.s32 128, 128
      %27 = vsyncadd [#allocation6], %s26
      %s29 = sshll.u32 [#allocation5], 4
      %s30 = int_to_ptr.vmem [resolvable:$true] %s29
      %32 = dma.hbm_to_vmem [thread:$0]  %s1, 128, %s30, [#allocation6]
    $region9: #{tpu_custom_call.1} parent=1 // pred_fallthru
      _
    // Predicated region
    $region10: #{tpu_custom_call.1} parent=1 // pred_check
      _
    $region11: #{tpu_custom_call.1} parent=1 // pred_check_branch
      %34 = sbr.rel (0) target = $region13
    $region12: #{tpu_custom_call.1} parent=1 // pred_region
      _
    $region13: #{tpu_custom_call.1} parent=1 // pred_fallthru
      _
    // Predicated region
    $region14: #{tpu_custom_call.1} parent=1 // pred_check
      _
    $region15: #{tpu_custom_call.1} parent=1 // pred_check_branch
      %36 = sbr.rel (0) target = $region17
    $region16: #{tpu_custom_call.1} parent=1 // pred_region
      %37 = dma.done [#allocation3], 768
    $region17: #{tpu_custom_call.1} parent=1 // pred_fallthru
      _
    // Predicated region
    $region18: #{tpu_custom_call.1} parent=1 // pred_check
      _
    $region19: #{tpu_custom_call.1} parent=1 // pred_check_branch
      %39 = sbr.rel (0) target = $region21
    $region20: #{tpu_custom_call.1} parent=1 // pred_region
      %40 = dma.done [#allocation6], 128
    $region21: #{tpu_custom_call.1} parent=1 // pred_fallthru
      _
    %v41 = vld [vmem:[#allocation5] sm:$0x3f]
    %v43 = vcombine.high %v41, %v41
    %v45 = vunpack.c.l.s4 1966171168
    %v46 = vunpack.c.0.s8 %v45
    %v47 = vlaneseq
    %v48 = vshrl.u32 %v47, 7
    %v49 = vsub.s32 %v46, %v48
    %v50 = vrot.slane %v41, %v49
    %v52 = vunpack.c.l.s4 1966171168
    %v53 = vunpack.c.0.s8 %v52
    %v54 = vlaneseq
    %v55 = vshrl.u32 %v54, 7
    %v56 = vsub.s32 %v53, %v55
    %v57 = vrot.slane %v43, %v56
    %v58 = vcombine.high %v50, %v50
    %v59 = vcombine.high %v57, %v57
    %v61 = vunpack.c.l.s4 1966171168
    %v62 = vunpack.c.0.s8 %v61
    %v63 = vlaneseq
    %v64 = vshrl.u32 %v63, 7
    %v65 = vsub.s32 %v62, %v64
    %v66 = vrot.slane %v50, %v65
    %v68 = vunpack.c.l.s4 1966171168
    %v69 = vunpack.c.0.s8 %v68
    %v70 = vlaneseq
    %v71 = vshrl.u32 %v70, 7
    %v72 = vsub.s32 %v69, %v71
    %v73 = vrot.slane %v57, %v72
    %v75 = vunpack.c.l.s4 1966171168
    %v76 = vunpack.c.0.s8 %v75
    %v77 = vlaneseq
    %v78 = vshrl.u32 %v77, 7
    %v79 = vsub.s32 %v76, %v78
    %v80 = vrot.slane %v58, %v79
    %v82 = vunpack.c.l.s4 1966171168
    %v83 = vunpack.c.0.s8 %v82
    %v84 = vlaneseq
    %v85 = vshrl.u32 %v84, 7
    %v86 = vsub.s32 %v83, %v85
    %v87 = vrot.slane %v59, %v86
    %v88 = vcombine.high %v66, %v66
    %v89 = vcombine.high %v80, %v80
    %v96 = vld [vmem:[%s2] sm:$0x1]
    %v97 = vsub.f32 1.0, %v66
    %v98 = vsub.f32 1.0, %v80
    %v99 = vsub.f32 1.0, %v88
    %v100 = vsub.f32 1.0, %v89
    %v101 = vsub.f32 1.0, %v73
    %v102 = vsub.f32 1.0, %v87
    %v103 = vmul.f32 %v97, %v96
    %v104 = vmul.f32 %v98, %v96
    %v105 = vmul.f32 %v99, %v96
    %v106 = vmul.f32 %v100, %v96
    %v107 = vmul.f32 %v101, %v96
    %v108 = vmul.f32 %v102, %v96
    %v109 = vld [vmem:[#allocation2] sm:$0xff]
    %v110 = vld [vmem:[#allocation2 + $0x8] sm:$0xff]
    %v111 = vld [vmem:[#allocation2 + $0x10] sm:$0xff]
    %v112 = vld [vmem:[#allocation2 + $0x18] sm:$0xff]
    %v113 = vld [vmem:[#allocation2 + $0x20] sm:$0xff]
    %v114 = vld [vmem:[#allocation2 + $0x28] sm:$0xff]
    %v115 = vlaneseq
    %v116 = vshrl.u32 %v115, 7
    %v117 = vsub.s32 0, %v116
    %v118 = vrot.slane %v66, %v117
    %v119 = vlaneseq
    %v120 = vshrl.u32 %v119, 7
    %v121 = vsub.s32 0, %v120
    %v122 = vrot.slane %v80, %v121
    %v123 = vlaneseq
    %v124 = vshrl.u32 %v123, 7
    %v125 = vsub.s32 0, %v124
    %v126 = vrot.slane %v88, %v125
    %v127 = vlaneseq
    %v128 = vshrl.u32 %v127, 7
    %v129 = vsub.s32 0, %v128
    %v130 = vrot.slane %v89, %v129
    %v131 = vlaneseq
    %v132 = vshrl.u32 %v131, 7
    %v133 = vsub.s32 0, %v132
    %v134 = vrot.slane %v73, %v133
    %v135 = vlaneseq
    %v136 = vshrl.u32 %v135, 7
    %v137 = vsub.s32 0, %v136
    %v138 = vrot.slane %v87, %v137
    %v145 = vmul.f32 %v118, %v109
    %v146 = vmul.f32 %v122, %v110
    %v147 = vmul.f32 %v126, %v111
    %v148 = vmul.f32 %v130, %v112
    %v149 = vmul.f32 %v134, %v113
    %v150 = vmul.f32 %v138, %v114
    %v157 = vlaneseq
    %v158 = vshrl.u32 %v157, 7
    %v159 = vsub.s32 0, %v158
    %v160 = vrot.slane %v103, %v159
    %v161 = vlaneseq
    %v162 = vshrl.u32 %v161, 7
    %v163 = vsub.s32 0, %v162
    %v164 = vrot.slane %v104, %v163
    %v165 = vlaneseq
    %v166 = vshrl.u32 %v165, 7
    %v167 = vsub.s32 0, %v166
    %v168 = vrot.slane %v105, %v167
    %v169 = vlaneseq
    %v170 = vshrl.u32 %v169, 7
    %v171 = vsub.s32 0, %v170
    %v172 = vrot.slane %v106, %v171
    %v173 = vlaneseq
    %v174 = vshrl.u32 %v173, 7
    %v175 = vsub.s32 0, %v174
    %v176 = vrot.slane %v107, %v175
    %v177 = vlaneseq
    %v178 = vshrl.u32 %v177, 7
    %v179 = vsub.s32 0, %v178
    %v180 = vrot.slane %v108, %v179
    %v187 = vadd.f32 %v160, %v145
    %v188 = vadd.f32 %v164, %v146
    %v189 = vadd.f32 %v168, %v147
    %v190 = vadd.f32 %v172, %v148
    %v191 = vadd.f32 %v176, %v149
    %v192 = vadd.f32 %v180, %v150
    %193 = vst [vmem:[#allocation7] sm:$0xff] %v187
    %194 = vst [vmem:[#allocation7 + $0x8] sm:$0xff] %v188
    %195 = vst [vmem:[#allocation7 + $0x10] sm:$0xff] %v189
    %196 = vst [vmem:[#allocation7 + $0x18] sm:$0xff] %v190
    %197 = vst [vmem:[#allocation7 + $0x20] sm:$0xff] %v191
    %198 = vst [vmem:[#allocation7 + $0x28] sm:$0xff] %v192
    // Predicated region
    $region22: #{tpu_custom_call.1} parent=1 // pred_check
      _
    $region23: #{tpu_custom_call.1} parent=1 // pred_check_branch
      %200 = sbr.rel (0) target = $region25
    $region24: #{tpu_custom_call.1} parent=1 // pred_region
      %s202 = ssub.s32 768, 768
      %203 = vsyncadd [#allocation4], %s202
      %s204 = sshll.u32 [#allocation7], 4
      %s205 = int_to_ptr.vmem [resolvable:$true] %s204
      %210 = dma.vmem_to_hbm [thread:$0]  %s205, 768, %s3, [#allocation4], 128, 128, 8
    $region25: #{tpu_custom_call.1} parent=1 // pred_fallthru
      _
    // Predicated region
    $region26: #{tpu_custom_call.1} parent=1 // pred_check
      _
    $region27: #{tpu_custom_call.1} parent=1 // pred_check_branch
      %212 = sbr.rel (0) target = $region29
    $region28: #{tpu_custom_call.1} parent=1 // pred_region
      %213 = dma.done [#allocation4], 768
    $region29: #{tpu_custom_call.1} parent=1 // pred_fallthru
      _
    %214 = vsyncpa [#allocation3], 1
    %215 = vsyncpa [#allocation6], 1
    %216 = vsyncpa [#allocation4], 1

</llo_original>
